<compile_context>
chip_gen: v7x
topology: tpu7x:2x2x1
jax: 0.10.0
libtpu: 0.0.40
codegen_flags: <defaults>
</compile_context>

<pallas_src>
import jax
import jax.numpy as jnp
from jax.experimental import pallas as pl
from jax.experimental.pallas import tpu as pltpu


def _round_up(x, m):
    return ((x + m - 1) // m) * m


def _make_mlp_kernel(compute_dtype):
    """Fused 4-layer MLP: relu(x@W1+b1) -> relu(@W2+b2) -> relu(@W3+b3) -> @W4+b4.

    Matmuls take `compute_dtype` (bf16 or f32) inputs and accumulate in f32;
    bias add and ReLU stay in f32; hidden activations are carried in
    `compute_dtype` between layers. Dropout = identity (eval semantics).
    """

    def kernel(x_ref,
               w1_ref, b1_ref,
               w2_ref, b2_ref,
               w3_ref, b3_ref,
               w4_ref, b4_ref,
               o_ref):
        def dense(h, w_ref, b_ref):
            return (jnp.dot(h, w_ref[...], preferred_element_type=jnp.float32)
                    + b_ref[...])

        h = x_ref[...].astype(compute_dtype)
        h = jnp.maximum(dense(h, w1_ref, b1_ref), 0.0).astype(compute_dtype)  # fc1+ReLU
        h = jnp.maximum(dense(h, w2_ref, b2_ref), 0.0).astype(compute_dtype)  # fc2+ReLU
        h = jnp.maximum(dense(h, w3_ref, b3_ref), 0.0).astype(compute_dtype)  # fc3+ReLU
        y = dense(h, w4_ref, b4_ref)                                          # fc4
        o_ref[...] = y.astype(o_ref.dtype)

    return kernel


def prepare_params(params, *, use_bf16_matmul=True):
    """One-time parameter prep (hoisted out of the per-call forward):
      * zero-pad fc3 width (and fc4 input rows) up to a multiple of 128 lanes,
      * cast weights to the MXU compute dtype (bf16 by default, f32 otherwise),
      * reshape biases to (1, F) f32 rows for in-kernel broadcast.
    Padding is exact: padded fc3 columns have zero weight+bias -> ReLU(0)=0,
    and the matching fc4 rows are zero, so they contribute nothing."""
    (w1, b1), (w2, b2), (w3, b3), (w4, b4) = params
    Din, H = w1.shape
    H2 = w3.shape[1]
    Dout = w4.shape[1]
    H2p = max(128, _round_up(H2, 128))

    w3p = jnp.zeros((H, H2p), w3.dtype).at[:, :H2].set(w3)
    b3p = jnp.zeros((H2p,), b3.dtype).at[:H2].set(b3)
    w4p = jnp.zeros((H2p, Dout), w4.dtype).at[:H2, :].set(w4)

    # TODO(synk): on v5e (no bf16 VALU) carrying activations in bf16 adds
    # convert work; numerically it is still correct on all generations.
    cd = jnp.bfloat16 if use_bf16_matmul else jnp.float32
    weights = tuple(w.astype(cd) for w in (w1, w2, w3p, w4p))
    biases = (b1.reshape(1, H).astype(jnp.float32),
              b2.reshape(1, H).astype(jnp.float32),
              b3p.reshape(1, H2p).astype(jnp.float32),
              b4.reshape(1, Dout).astype(jnp.float32))
    dims = dict(Din=int(Din), H=int(H), H2p=int(H2p), Dout=int(Dout))
    return dict(weights=weights, biases=biases, compute_dtype=cd, dims=dims)


def mlp_localization_forward(x, prepared, *, batch_tile=2048):
    """Fused MLP forward on pre-prepared params.

    Tiling:
      * B <= 128              : one grid step over the whole batch.
      * 128 < B <= batch_tile : two grid steps (lets the "parallel" batch axis
                                shard across v7x's two TensorCores).
      * B  > batch_tile       : tiles of `batch_tile` rows, grid=cdiv(B,tile);
                                the ragged last block is handled by masked
                                boundary stores (no zero-pad copy of x).
    """
    weights = prepared["weights"]
    biases = prepared["biases"]
    cd = prepared["compute_dtype"]
    d = prepared["dims"]
    Din, H, H2p, Dout = d["Din"], d["H"], d["H2p"], d["Dout"]

    B, Din_x = x.shape
    assert Din_x == Din, f"expected {Din} input features, got {Din_x}"
    out_dtype = x.dtype
    if x.dtype != cd:
        x = x.astype(cd)  # single cheap cast; halves the x DMA on the bf16 path

    batch_tile = max(8, _round_up(int(batch_tile), 8))
    if B <= batch_tile:
        # Small batch: one fat step. Mid-size batch: force >=2 steps for v7x
        # megacore sharding (tile stays a multiple of 8 for the (8,128) rule).
        tile = B if B <= 128 else _round_up(pl.cdiv(B, 2), 8)
    else:
        tile = batch_tile
    grid = (pl.cdiv(B, tile),)

    # VMEM budget: double-buffered x / out tiles + weights + f32 intermediates.
    # Clamp to [32 MiB, 64 MiB] (v7x has 64 MiB physical per TC; v5e/v6e 128).
    in_isz = 2 if cd == jnp.bfloat16 else 4
    out_isz = 2 if out_dtype == jnp.bfloat16 else 4
    w_bytes = sum(int(a.size) * a.dtype.itemsize for a in weights + biases)
    vmem_est = (2 * tile * Din * in_isz
                + 2 * tile * Dout * out_isz
                + 2 * w_bytes
                + 3 * tile * max(H, H2p) * 4)
    vmem_limit = int(min(64 << 20, max(32 << 20, int(1.25 * vmem_est) + (2 << 20))))

    flops = 2 * B * (Din * H + H * H + H * H2p + H2p * Dout)
    bytes_accessed = B * Din * in_isz + w_bytes + B * Dout * out_isz

    # Grid-invariant weight/bias blocks: the pipeline does not re-DMA a block
    # whose index_map output is unchanged between consecutive steps.
    def const_spec(shape):
        return pl.BlockSpec(shape, lambda i: (0, 0))

    w1, w2, w3, w4 = weights
    b1, b2, b3, b4 = biases

    out = pl.pallas_call(
        _make_mlp_kernel(cd),
        out_shape=jax.ShapeDtypeStruct((B, Dout), out_dtype),
        grid_spec=pltpu.PrefetchScalarGridSpec(
            num_scalar_prefetch=0,
            grid=grid,
            in_specs=[
                pl.BlockSpec((tile, Din), lambda i: (i, 0)),      # x tile
                const_spec((Din, H)),    const_spec((1, H)),      # fc1
                const_spec((H, H)),      const_spec((1, H)),      # fc2
                const_spec((H, H2p)),    const_spec((1, H2p)),    # fc3 (padded width)
                const_spec((H2p, Dout)), const_spec((1, Dout)),   # fc4 (unpadded out)
            ],
            out_specs=pl.BlockSpec((tile, Dout), lambda i: (i, 0)),
        ),
        compiler_params=pltpu.CompilerParams(
            dimension_semantics=("parallel",),
            vmem_limit_bytes=vmem_limit),
        cost_estimate=pl.CostEstimate(
            flops=flops, transcendentals=0, bytes_accessed=bytes_accessed),
    )(x, w1, b1, w2, b2, w3, b3, w4, b4)

    return out


def init_params(key, in_channels, hidden_channels=128, out_channels=2,
                dtype=jnp.float32):
    """PyTorch-Linear-style init: U(-1/sqrt(fan_in), 1/sqrt(fan_in)).
    Weights stored transposed relative to PyTorch, i.e. (fan_in, fan_out)."""
    dims = [
        (in_channels, hidden_channels),
        (hidden_channels, hidden_channels),
        (hidden_channels, hidden_channels // 2),
        (hidden_channels // 2, out_channels),
    ]
    params = []
    for (fan_in, fan_out) in dims:
        key, kw, kb = jax.random.split(key, 3)
        bound = 1.0 / jnp.sqrt(jnp.array(fan_in, dtype))
        w = jax.random.uniform(kw, (fan_in, fan_out), dtype,
                               minval=-bound, maxval=bound)
        b = jax.random.uniform(kb, (fan_out,), dtype,
                               minval=-bound, maxval=bound)
        params.append((w, b))
    return params


def reference_forward(x, params):
    """Plain-JAX reference of the PyTorch forward (dropout = identity)."""
    (w1, b1), (w2, b2), (w3, b3), (w4, b4) = params
    h = jnp.maximum(x @ w1 + b1, 0.0)
    h = jnp.maximum(h @ w2 + b2, 0.0)
    h = jnp.maximum(h @ w3 + b3, 0.0)
    return h @ w4 + b4


if __name__ == "__main__":
    key = jax.random.PRNGKey(0)
    key, kx, kp = jax.random.split(key, 3)

    batch = 16
    in_channels = 32
    hidden_channels = 128
    out_channels = 2

    x = jax.random.normal(kx, (batch, in_channels), jnp.float32)
    params = init_params(kp, in_channels, hidden_channels, out_channels)
    ref = reference_forward(x, params)

    # TODO(synk): dropout implemented as identity (eval mode); training-mode
    # stochastic dropout would use pltpu.prng_seed / prng_random_bits.

    # f32 path: exact-ish check, single grid step (B <= 128).
    prep_f32 = prepare_params(params, use_bf16_matmul=False)
    out_f32 = jax.block_until_ready(mlp_localization_forward(x, prep_f32))
    assert out_f32.shape == (batch, out_channels)
    assert jnp.allclose(out_f32, ref, atol=1e-5, rtol=1e-5), "mismatch (f32, small batch)"

    # Default bf16-matmul path (f32 accumulation): loose check.
    prep_bf16 = prepare_params(params, use_bf16_matmul=True)
    out_bf16 = jax.block_until_ready(mlp_localization_forward(x, prep_bf16))
    assert out_bf16.shape == (batch, out_channels)
    assert jnp.allclose(out_bf16, ref, atol=1e-1, rtol=1e-1), "mismatch (bf16, small batch)"

    # Mid-size batch: two-step grid (v7x 2-TC split) with ragged/masked tail.
    xm = jax.random.normal(jax.random.PRNGKey(1), (300, in_channels), jnp.float32)
    refm = reference_forward(xm, params)
    outm = jax.block_until_ready(mlp_localization_forward(xm, prep_f32))
    assert outm.shape == (300, out_channels)
    assert jnp.allclose(outm, refm, atol=1e-5, rtol=1e-5), "mismatch (f32, 2-step grid)"

    # Large-batch tiled path (B > batch_tile) with ragged last block.
    outm2 = jax.block_until_ready(
        mlp_localization_forward(xm, prep_f32, batch_tile=128))
    assert outm2.shape == (300, out_channels)
    assert jnp.allclose(outm2, refm, atol=1e-5, rtol=1e-5), "mismatch (f32, tiled grid)"

    print("KERNEL_OK")
</pallas_src>

<mosaic_0001>
module attributes {stable_mosaic.version = 11 : i64} {
  func.func @kernel(%arg0: i32, %arg1: memref<16x32xf32, #tpu.memory_space<vmem>>, %arg2: memref<32x128xf32, #tpu.memory_space<vmem>>, %arg3: memref<1x128xf32, #tpu.memory_space<vmem>>, %arg4: memref<128x128xf32, #tpu.memory_space<vmem>>, %arg5: memref<1x128xf32, #tpu.memory_space<vmem>>, %arg6: memref<128x128xf32, #tpu.memory_space<vmem>>, %arg7: memref<1x128xf32, #tpu.memory_space<vmem>>, %arg8: memref<128x2xf32, #tpu.memory_space<vmem>>, %arg9: memref<1x2xf32, #tpu.memory_space<vmem>>, %arg10: memref<16x2xf32, #tpu.memory_space<vmem>>) attributes {dimension_semantics = [#tpu.dimension_semantics<parallel>], iteration_bounds = array<i64: 1>, scalar_prefetch = 0 : i64, scratch_operands = 0 : i64, tpu.core_type = #tpu.core_type<tc>, window_params = [{transform_indices = @transform_0, window_bounds = array<i64: 16, 32>}, {pipeline_mode = #tpu.pipeline_mode<synchronous>, transform_indices = @transform_1, window_bounds = array<i64: 32, 128>}, {pipeline_mode = #tpu.pipeline_mode<synchronous>, transform_indices = @transform_2, window_bounds = array<i64: 1, 128>}, {pipeline_mode = #tpu.pipeline_mode<synchronous>, transform_indices = @transform_3, window_bounds = array<i64: 128, 128>}, {pipeline_mode = #tpu.pipeline_mode<synchronous>, transform_indices = @transform_4, window_bounds = array<i64: 1, 128>}, {pipeline_mode = #tpu.pipeline_mode<synchronous>, transform_indices = @transform_5, window_bounds = array<i64: 128, 128>}, {pipeline_mode = #tpu.pipeline_mode<synchronous>, transform_indices = @transform_6, window_bounds = array<i64: 1, 128>}, {pipeline_mode = #tpu.pipeline_mode<synchronous>, transform_indices = @transform_7, window_bounds = array<i64: 128, 2>}, {pipeline_mode = #tpu.pipeline_mode<synchronous>, transform_indices = @transform_8, window_bounds = array<i64: 1, 2>}, {transform_indices = @transform_9, window_bounds = array<i64: 16, 2>}]} {
    %c0 = arith.constant 0 : index
    %c0_0 = arith.constant 0 : index
    %0 = vector.load %arg1[%c0, %c0_0] : memref<16x32xf32, #tpu.memory_space<vmem>>, vector<16x32xf32>
    %c0_1 = arith.constant 0 : index
    %c0_2 = arith.constant 0 : index
    %1 = vector.load %arg2[%c0_1, %c0_2] : memref<32x128xf32, #tpu.memory_space<vmem>>, vector<32x128xf32>
    %cst = arith.constant dense<0.000000e+00> : vector<16x128xf32>
    %2 = tpu.matmul %0, %1, %cst {dimension_numbers = #tpu.dot_dimension_numbers<[1], [0], [0], [1], [0, 0, 1, 1], [], []>} : vector<16x32xf32>, vector<32x128xf32>, vector<16x128xf32> -> vector<16x128xf32>
    %c0_3 = arith.constant 0 : index
    %c0_4 = arith.constant 0 : index
    %3 = vector.load %arg3[%c0_3, %c0_4] : memref<1x128xf32, #tpu.memory_space<vmem>>, vector<1x128xf32>
    %4 = vector.broadcast %3 : vector<1x128xf32> to vector<16x128xf32>
    %5 = arith.addf %2, %4 : vector<16x128xf32>
    %cst_5 = arith.constant 0.000000e+00 : f32
    %6 = vector.broadcast %cst_5 : f32 to vector<16x128xf32>
    %7 = arith.maximumf %5, %6 : vector<16x128xf32>
    %c0_6 = arith.constant 0 : index
    %c0_7 = arith.constant 0 : index
    %8 = vector.load %arg4[%c0_6, %c0_7] : memref<128x128xf32, #tpu.memory_space<vmem>>, vector<128x128xf32>
    %cst_8 = arith.constant dense<0.000000e+00> : vector<16x128xf32>
    %9 = tpu.matmul %7, %8, %cst_8 {dimension_numbers = #tpu.dot_dimension_numbers<[1], [0], [0], [1], [0, 0, 1, 1], [], []>} : vector<16x128xf32>, vector<128x128xf32>, vector<16x128xf32> -> vector<16x128xf32>
    %c0_9 = arith.constant 0 : index
    %c0_10 = arith.constant 0 : index
    %10 = vector.load %arg5[%c0_9, %c0_10] : memref<1x128xf32, #tpu.memory_space<vmem>>, vector<1x128xf32>
    %11 = vector.broadcast %10 : vector<1x128xf32> to vector<16x128xf32>
    %12 = arith.addf %9, %11 : vector<16x128xf32>
    %cst_11 = arith.constant 0.000000e+00 : f32
    %13 = vector.broadcast %cst_11 : f32 to vector<16x128xf32>
    %14 = arith.maximumf %12, %13 : vector<16x128xf32>
    %c0_12 = arith.constant 0 : index
    %c0_13 = arith.constant 0 : index
    %15 = vector.load %arg6[%c0_12, %c0_13] : memref<128x128xf32, #tpu.memory_space<vmem>>, vector<128x128xf32>
    %cst_14 = arith.constant dense<0.000000e+00> : vector<16x128xf32>
    %16 = tpu.matmul %14, %15, %cst_14 {dimension_numbers = #tpu.dot_dimension_numbers<[1], [0], [0], [1], [0, 0, 1, 1], [], []>} : vector<16x128xf32>, vector<128x128xf32>, vector<16x128xf32> -> vector<16x128xf32>
    %c0_15 = arith.constant 0 : index
    %c0_16 = arith.constant 0 : index
    %17 = vector.load %arg7[%c0_15, %c0_16] : memref<1x128xf32, #tpu.memory_space<vmem>>, vector<1x128xf32>
    %18 = vector.broadcast %17 : vector<1x128xf32> to vector<16x128xf32>
    %19 = arith.addf %16, %18 : vector<16x128xf32>
    %cst_17 = arith.constant 0.000000e+00 : f32
    %20 = vector.broadcast %cst_17 : f32 to vector<16x128xf32>
    %21 = arith.maximumf %19, %20 : vector<16x128xf32>
    %c0_18 = arith.constant 0 : index
    %c0_19 = arith.constant 0 : index
    %22 = vector.load %arg8[%c0_18, %c0_19] : memref<128x2xf32, #tpu.memory_space<vmem>>, vector<128x2xf32>
    %cst_20 = arith.constant dense<0.000000e+00> : vector<16x2xf32>
    %23 = tpu.matmul %21, %22, %cst_20 {dimension_numbers = #tpu.dot_dimension_numbers<[1], [0], [0], [1], [0, 0, 1, 1], [], []>} : vector<16x128xf32>, vector<128x2xf32>, vector<16x2xf32> -> vector<16x2xf32>
    %c0_21 = arith.constant 0 : index
    %c0_22 = arith.constant 0 : index
    %24 = vector.load %arg9[%c0_21, %c0_22] : memref<1x2xf32, #tpu.memory_space<vmem>>, vector<1x2xf32>
    %25 = vector.broadcast %24 : vector<1x2xf32> to vector<16x2xf32>
    %26 = arith.addf %23, %25 : vector<16x2xf32>
    %c0_23 = arith.constant 0 : index
    %c0_24 = arith.constant 0 : index
    %27 = vector.load %arg10[%c0_23, %c0_24] : memref<16x2xf32, #tpu.memory_space<vmem>>, vector<16x2xf32>
    tpu.vector_store %arg10[%c0_23, %c0_24], %26 {strides = array<i32>} : memref<16x2xf32, #tpu.memory_space<vmem>>, vector<16x2xf32>,
    return
  }
  func.func @transform_0(%arg0: i32) -> (i32, i32) {
    %c0_i32 = arith.constant 0 : i32
    %c0_i32_0 = arith.constant 0 : i32
    return %arg0, %c0_i32 : i32, i32
  }
  func.func @transform_1(%arg0: i32) -> (i32, i32) {
    %c0_i32 = arith.constant 0 : i32
    %c0_i32_0 = arith.constant 0 : i32
    %c0_i32_1 = arith.constant 0 : i32
    return %c0_i32, %c0_i32_0 : i32, i32
  }
  func.func @transform_2(%arg0: i32) -> (i32, i32) {
    %c0_i32 = arith.constant 0 : i32
    %c0_i32_0 = arith.constant 0 : i32
    %c0_i32_1 = arith.constant 0 : i32
    return %c0_i32, %c0_i32_0 : i32, i32
  }
  func.func @transform_3(%arg0: i32) -> (i32, i32) {
    %c0_i32 = arith.constant 0 : i32
    %c0_i32_0 = arith.constant 0 : i32
    %c0_i32_1 = arith.constant 0 : i32
    return %c0_i32, %c0_i32_0 : i32, i32
  }
  func.func @transform_4(%arg0: i32) -> (i32, i32) {
    %c0_i32 = arith.constant 0 : i32
    %c0_i32_0 = arith.constant 0 : i32
    %c0_i32_1 = arith.constant 0 : i32
    return %c0_i32, %c0_i32_0 : i32, i32
  }
  func.func @transform_5(%arg0: i32) -> (i32, i32) {
    %c0_i32 = arith.constant 0 : i32
    %c0_i32_0 = arith.constant 0 : i32
    %c0_i32_1 = arith.constant 0 : i32
    return %c0_i32, %c0_i32_0 : i32, i32
  }
  func.func @transform_6(%arg0: i32) -> (i32, i32) {
    %c0_i32 = arith.constant 0 : i32
    %c0_i32_0 = arith.constant 0 : i32
    %c0_i32_1 = arith.constant 0 : i32
    return %c0_i32, %c0_i32_0 : i32, i32
  }
  func.func @transform_7(%arg0: i32) -> (i32, i32) {
    %c0_i32 = arith.constant 0 : i32
    %c0_i32_0 = arith.constant 0 : i32
    %c0_i32_1 = arith.constant 0 : i32
    return %c0_i32, %c0_i32_0 : i32, i32
  }
  func.func @transform_8(%arg0: i32) -> (i32, i32) {
    %c0_i32 = arith.constant 0 : i32
    %c0_i32_0 = arith.constant 0 : i32
    %c0_i32_1 = arith.constant 0 : i32
    return %c0_i32, %c0_i32_0 : i32, i32
  }
  func.func @transform_9(%arg0: i32) -> (i32, i32) {
    %c0_i32 = arith.constant 0 : i32
    %c0_i32_0 = arith.constant 0 : i32
    return %arg0, %c0_i32 : i32, i32
  }
}

</mosaic_0001>

<llo_original>
// kernel: tpu_custom_call.1
$region0: #{tpu_custom_call.1}
  #allocation0 [shape = 'u32[]', space=smem, size = 0x4, offset = 0x4, fixed_abs, tag = 'smem constant byte address 0x4 - core index']
  #allocation1 [shape = 'u32[144,128]{1,0:T(1,128)}', space=vmem, size = 0x12000, scoped, tag = 'internal scratch']
  %s0 = inlined_call_operand.hbm [shape: f32[16,32], index: 0, kind: input, shape index: {}]
  %s1 = inlined_call_operand.hbm [shape: f32[32,128], index: 1, kind: input, shape index: {}]
  %s2 = inlined_call_operand.vmem [shape: f32[1,128], index: 2, kind: input, shape index: {}]
  %s3 = inlined_call_operand.vmem [shape: f32[128,128], index: 3, kind: input, shape index: {}]
  %s4 = inlined_call_operand.vmem [shape: f32[1,128], index: 4, kind: input, shape index: {}]
  %s5 = inlined_call_operand.hbm [shape: f32[128,128], index: 5, kind: input, shape index: {}]
  %s6 = inlined_call_operand.vmem [shape: f32[1,128], index: 6, kind: input, shape index: {}]
  %s7 = inlined_call_operand.vmem [shape: f32[128,2], index: 7, kind: input, shape index: {}]
  %s8 = inlined_call_operand.vmem [shape: f32[1,2], index: 8, kind: input, shape index: {}]
  %s9 = inlined_call_operand.vmem [shape: f32[16,2], index: 9, kind: output, shape index: {}]
  %s10 = sld [smem:[#allocation0]]
  $region58: #{tpu_custom_call.1} parent=0
    _
  %s12 = ssub.s32 1, %s10
  %s13 = scalar_select 0, %s12, %s10
  $region1: #{tpu_custom_call.1} parent=0
    #allocation2 [shape = 'u8[8192]{0}', space=vmem, size = 0x2000, scoped, tag = 'input window, operand 0, single buffered']
    #allocation3 [shape = 's32[1]{0}', space=sflag, size = 0x4, scoped, tag = 'scoped memory for tpu_custom_call.1']
    #allocation4 [shape = 'u8[16384]{0}', space=vmem, size = 0x4000, scoped, tag = 'input window, operand 1, single buffered']
    #allocation5 [shape = 's32[1]{0}', space=sflag, size = 0x4, scoped, tag = 'scoped memory for tpu_custom_call.1']
    #allocation6 [shape = 'u8[65536]{0}', space=vmem, size = 0x10000, scoped, tag = 'input window, operand 5, single buffered']
    %14 = vsyncpa [#allocation3], 0
    %15 = vsyncpa [#allocation5], 0
    // Predicated region
    $region2: #{tpu_custom_call.1} parent=1 // pred_check
      _
    $region3: #{tpu_custom_call.1} parent=1 // pred_check_branch
      %17 = sbr.rel (0) target = $region5
    $region4: #{tpu_custom_call.1} parent=1 // pred_region
      %s19 = ssub.s32 256, 256
      %20 = vsyncadd [#allocation3], %s19
      %s21 = sshll.u32 [#allocation2], 4
      %s22 = int_to_ptr.vmem [resolvable:$true] %s21
      %27 = dma.hbm_to_vmem [thread:$0]  %s0, 256, %s22, [#allocation3], 128, 128, 8
    $region5: #{tpu_custom_call.1} parent=1 // pred_fallthru
      _
    // Predicated region
    $region6: #{tpu_custom_call.1} parent=1 // pred_check
      _
    $region7: #{tpu_custom_call.1} parent=1 // pred_check_branch
      %29 = sbr.rel (0) target = $region9
    $region8: #{tpu_custom_call.1} parent=1 // pred_region
      %s31 = ssub.s32 512, 512
      %32 = vsyncadd [#allocation5], %s31
      %s33 = sshll.u32 [#allocation4], 4
      %s34 = int_to_ptr.vmem [resolvable:$true] %s33
      %39 = dma.hbm_to_vmem [thread:$0]  %s1, 512, %s34, [#allocation5], 128, 128, 8
    $region9: #{tpu_custom_call.1} parent=1 // pred_fallthru
      _
    // Predicated region
    $region10: #{tpu_custom_call.1} parent=1 // pred_check
      _
    $region11: #{tpu_custom_call.1} parent=1 // pred_check_branch
      %41 = sbr.rel (0) target = $region13
    $region12: #{tpu_custom_call.1} parent=1 // pred_region
      _
    $region13: #{tpu_custom_call.1} parent=1 // pred_fallthru
      _
    // Predicated region
    $region14: #{tpu_custom_call.1} parent=1 // pred_check
      _
    $region15: #{tpu_custom_call.1} parent=1 // pred_check_branch
      %43 = sbr.rel (0) target = $region17
    $region16: #{tpu_custom_call.1} parent=1 // pred_region
      _
    $region17: #{tpu_custom_call.1} parent=1 // pred_fallthru
      _
    // Predicated region
    $region18: #{tpu_custom_call.1} parent=1 // pred_check
      _
    $region19: #{tpu_custom_call.1} parent=1 // pred_check_branch
      %45 = sbr.rel (0) target = $region21
    $region20: #{tpu_custom_call.1} parent=1 // pred_region
      _
    $region21: #{tpu_custom_call.1} parent=1 // pred_fallthru
      _
    // Predicated region
    $region22: #{tpu_custom_call.1} parent=1 // pred_check
      _
    $region23: #{tpu_custom_call.1} parent=1 // pred_check_branch
      %47 = sbr.rel (0) target = $region25
    $region24: #{tpu_custom_call.1} parent=1 // pred_region
      %s49 = ssub.s32 2048, 2048
      %50 = vsyncadd [#allocation5], %s49
      %s51 = sshll.u32 [#allocation6], 4
      %s52 = int_to_ptr.vmem [resolvable:$true] %s51
      %57 = dma.hbm_to_vmem [thread:$0]  %s5, 2048, %s52, [#allocation5], 128, 128, 8
    $region25: #{tpu_custom_call.1} parent=1 // pred_fallthru
      _
    // Predicated region
    $region26: #{tpu_custom_call.1} parent=1 // pred_check
      _
    $region27: #{tpu_custom_call.1} parent=1 // pred_check_branch
      %59 = sbr.rel (0) target = $region29
    $region28: #{tpu_custom_call.1} parent=1 // pred_region
      _
    $region29: #{tpu_custom_call.1} parent=1 // pred_fallthru
      _
    // Predicated region
    $region30: #{tpu_custom_call.1} parent=1 // pred_check
      _
    $region31: #{tpu_custom_call.1} parent=1 // pred_check_branch
      %61 = sbr.rel (0) target = $region33
    $region32: #{tpu_custom_call.1} parent=1 // pred_region
      _
    $region33: #{tpu_custom_call.1} parent=1 // pred_fallthru
      _
    // Predicated region
    $region34: #{tpu_custom_call.1} parent=1 // pred_check
      _
    $region35: #{tpu_custom_call.1} parent=1 // pred_check_branch
      %63 = sbr.rel (0) target = $region37
    $region36: #{tpu_custom_call.1} parent=1 // pred_region
      _
    $region37: #{tpu_custom_call.1} parent=1 // pred_fallthru
      _
    // Predicated region
    $region38: #{tpu_custom_call.1} parent=1 // pred_check
      _
    $region39: #{tpu_custom_call.1} parent=1 // pred_check_branch
      %65 = sbr.rel (0) target = $region41
    $region40: #{tpu_custom_call.1} parent=1 // pred_region
      %66 = dma.done [#allocation3], 256
    $region41: #{tpu_custom_call.1} parent=1 // pred_fallthru
      _
    // Predicated region
    $region42: #{tpu_custom_call.1} parent=1 // pred_check
      _
    $region43: #{tpu_custom_call.1} parent=1 // pred_check_branch
      %68 = sbr.rel (0) target = $region45
    $region44: #{tpu_custom_call.1} parent=1 // pred_region
      %69 = dma.done [#allocation5], 512
    $region45: #{tpu_custom_call.1} parent=1 // pred_fallthru
      _
    // Predicated region
    $region46: #{tpu_custom_call.1} parent=1 // pred_check
      _
    $region47: #{tpu_custom_call.1} parent=1 // pred_check_branch
      %71 = sbr.rel (0) target = $region49
    $region48: #{tpu_custom_call.1} parent=1 // pred_region
      %72 = dma.done [#allocation5], 2048
    $region49: #{tpu_custom_call.1} parent=1 // pred_fallthru
      _
    %v73 = vld [vmem:[#allocation2] sm:$0xff]
    %v74 = vld [vmem:[#allocation2 + $0x8] sm:$0xff]
    %v75 = vld [vmem:[#allocation4] sm:$0xff]
    %v76 = vld [vmem:[#allocation4 + $0x8] sm:$0xff]
    %v77 = vld [vmem:[#allocation4 + $0x10] sm:$0xff]
    %v78 = vld [vmem:[#allocation4 + $0x18] sm:$0xff]
    %v79 = vld [vmem:[%s2] sm:$0x1]
    %v81 = vlaneseq
    %v82 = vshrl.u32 %v81, 7
    %v83 = vsub.s32 0, %v82
    %v84 = vrot.slane %v79, %v83
    %vm86 = vcmask 261120
    %v88 = vsel %vm86, %v73, 0
    %v91 = vsel %vm86, %v74, 0
    %93 = vmatprep.subr.mxu0 0.0
    %94 = vmatpush1.msra.mxu0 %v75
    %95 = vmatprep.subr.mxu0 0.0
    %96 = vmatpush1.msra.mxu0 %v76
    %97 = vmatprep.subr.mxu0 0.0
    %98 = vmatpush1.msra.mxu0 %v77
    %99 = vmatprep.subr.mxu0 0.0
    %100 = vmatpush1.msra.mxu0 %v78
    %101 = vmatprep.subr.mxu0 0.0
    %102 = vmatpush1.msra.mxu0 0.0
    %103 = vmatprep.subr.mxu0 0.0
    %104 = vmatpush1.msra.mxu0 0.0
    %105 = vmatprep.subr.mxu0 0.0
    %106 = vmatpush1.msra.mxu0 0.0
    %107 = vmatprep.subr.mxu0 0.0
    %108 = vmatpush1.msra.mxu0 0.0
    %109 = vmatprep.subr.mxu0 0.0
    %110 = vmatpush1.msra.mxu0 0.0
    %111 = vmatprep.subr.mxu0 0.0
    %112 = vmatpush1.msra.mxu0 0.0
    %113 = vmatprep.subr.mxu0 0.0
    %114 = vmatpush1.msra.mxu0 0.0
    %115 = vmatprep.subr.mxu0 0.0
    %116 = vmatpush1.msra.mxu0 0.0
    %117 = vmatprep.subr.mxu0 0.0
    %118 = vmatpush1.msra.mxu0 0.0
    %119 = vmatprep.subr.mxu0 0.0
    %120 = vmatpush1.msra.mxu0 0.0
    %121 = vmatprep.subr.mxu0 0.0
    %122 = vmatpush1.msra.mxu0 0.0
    %123 = vmatprep.subr.mxu0 0.0
    %124 = vmatpush1.msra.mxu0 0.0
    %125 = vmatprep.subr.mxu0 0.0
    %126 = vmatpush1.msra.mxu0 0.0
    %127 = vmatprep.subr.mxu0 0.0
    %128 = vmatpush1.msra.mxu0 0.0
    %129 = vmatprep.subr.mxu0 0.0
    %130 = vmatpush1.msra.mxu0 0.0
    %131 = vmatprep.subr.mxu0 0.0
    %132 = vmatpush1.msra.mxu0 0.0
    %133 = vmatprep.subr.mxu0 0.0
    %134 = vmatpush1.msra.mxu0 0.0
    %135 = vmatprep.subr.mxu0 0.0
    %136 = vmatpush1.msra.mxu0 0.0
    %137 = vmatprep.subr.mxu0 0.0
    %138 = vmatpush1.msra.mxu0 0.0
    %139 = vmatprep.subr.mxu0 0.0
    %140 = vmatpush1.msra.mxu0 0.0
    %141 = vmatprep.subr.mxu0 0.0
    %142 = vmatpush1.msra.mxu0 0.0
    %143 = vmatprep.subr.mxu0 0.0
    %144 = vmatpush1.msra.mxu0 0.0
    %145 = vmatprep.subr.mxu0 0.0
    %146 = vmatpush1.msra.mxu0 0.0
    %147 = vmatprep.subr.mxu0 0.0
    %148 = vmatpush1.msra.mxu0 0.0
    %149 = vmatprep.subr.mxu0 0.0
    %150 = vmatpush1.msra.mxu0 0.0
    %151 = vmatprep.subr.mxu0 0.0
    %152 = vmatpush1.msra.mxu0 0.0
    %153 = vmatprep.subr.mxu0 0.0
    %154 = vmatpush1.msra.mxu0 0.0
    %155 = vmatprep.subr.mxu0 0.0
    %156 = vmatpush1.msra.mxu0 0.0
    %157 = vmatprep.mubr.f32.mxu0 0.0
    %158 = vmatmul.mubr.f32.gmra.mrb[0].mxu0 %v88
    %v159 = vpop.f32.mrb[0].mxu0
    %v160 = vadd.f32 %v84, %v159
    %v161 = vpop.f32.mrb[0].mxu0
    %162 = vmatprep.mubr.f32.mxu0 0.0
    %163 = vmatmul.mubr.f32.gmra.mrb[0].mxu0 %v91
    %v164 = vpop.f32.mrb[0].mxu0
    %v165 = vadd.f32 %v84, %v164
    %v166 = vpop.f32.mrb[0].mxu0
    %167 = vdwg.mxu0
    %v168 = vmax.f32 %v160, 0.0
    %v169 = vmax.f32 %v165, 0.0
    %v170 = vld [vmem:[%s3] sm:$0xff]
    %v171 = vld [vmem:[%s3 + $0x8] sm:$0xff]
    %v172 = vld [vmem:[%s3 + $0x10] sm:$0xff]
    %v173 = vld [vmem:[%s3 + $0x18] sm:$0xff]
    %v174 = vld [vmem:[%s3 + $0x20] sm:$0xff]
    %v175 = vld [vmem:[%s3 + $0x28] sm:$0xff]
    %v176 = vld [vmem:[%s3 + $0x30] sm:$0xff]
    %v177 = vld [vmem:[%s3 + $0x38] sm:$0xff]
    %v178 = vld [vmem:[%s3 + $0x40] sm:$0xff]
    %v179 = vld [vmem:[%s3 + $0x48] sm:$0xff]
    %v180 = vld [vmem:[%s3 + $0x50] sm:$0xff]
    %v181 = vld [vmem:[%s3 + $0x58] sm:$0xff]
    %v182 = vld [vmem:[%s3 + $0x60] sm:$0xff]
    %v183 = vld [vmem:[%s3 + $0x68] sm:$0xff]
    %v184 = vld [vmem:[%s3 + $0x70] sm:$0xff]
    %v185 = vld [vmem:[%s3 + $0x78] sm:$0xff]
    %v186 = vld [vmem:[%s4] sm:$0x1]
    %v188 = vlaneseq
    %v189 = vshrl.u32 %v188, 7
    %v190 = vsub.s32 0, %v189
    %v191 = vrot.slane %v186, %v190
    %193 = vmatprep.subr.mxu0 0.0
    %194 = vmatpush1.msra.mxu0 %v170
    %195 = vmatprep.subr.mxu0 0.0
    %196 = vmatpush1.msra.mxu0 %v171
    %197 = vmatprep.subr.mxu0 0.0
    %198 = vmatpush1.msra.mxu0 %v172
    %199 = vmatprep.subr.mxu0 0.0
    %200 = vmatpush1.msra.mxu0 %v173
    %201 = vmatprep.subr.mxu0 0.0
    %202 = vmatpush1.msra.mxu0 %v174
    %203 = vmatprep.subr.mxu0 0.0
    %204 = vmatpush1.msra.mxu0 %v175
    %205 = vmatprep.subr.mxu0 0.0
    %206 = vmatpush1.msra.mxu0 %v176
    %207 = vmatprep.subr.mxu0 0.0
    %208 = vmatpush1.msra.mxu0 %v177
    %209 = vmatprep.subr.mxu0 0.0
    %210 = vmatpush1.msra.mxu0 %v178
    %211 = vmatprep.subr.mxu0 0.0
    %212 = vmatpush1.msra.mxu0 %v179
    %213 = vmatprep.subr.mxu0 0.0
    %214 = vmatpush1.msra.mxu0 %v180
    %215 = vmatprep.subr.mxu0 0.0
    %216 = vmatpush1.msra.mxu0 %v181
    %217 = vmatprep.subr.mxu0 0.0
    %218 = vmatpush1.msra.mxu0 %v182
    %219 = vmatprep.subr.mxu0 0.0
    %220 = vmatpush1.msra.mxu0 %v183
    %221 = vmatprep.subr.mxu0 0.0
    %222 = vmatpush1.msra.mxu0 %v184
    %223 = vmatprep.subr.mxu0 0.0
    %224 = vmatpush1.msra.mxu0 %v185
    %225 = vmatprep.subr.mxu0 0.0
    %226 = vmatpush1.msra.mxu0 0.0
    %227 = vmatprep.subr.mxu0 0.0
    %228 = vmatpush1.msra.mxu0 0.0
    %229 = vmatprep.subr.mxu0 0.0
    %230 = vmatpush1.msra.mxu0 0.0
    %231 = vmatprep.subr.mxu0 0.0
    %232 = vmatpush1.msra.mxu0 0.0
    %233 = vmatprep.subr.mxu0 0.0
    %234 = vmatpush1.msra.mxu0 0.0
    %235 = vmatprep.subr.mxu0 0.0
    %236 = vmatpush1.msra.mxu0 0.0
    %237 = vmatprep.subr.mxu0 0.0
    %238 = vmatpush1.msra.mxu0 0.0
    %239 = vmatprep.subr.mxu0 0.0
    %240 = vmatpush1.msra.mxu0 0.0
    %241 = vmatprep.subr.mxu0 0.0
    %242 = vmatpush1.msra.mxu0 0.0
    %243 = vmatprep.subr.mxu0 0.0
    %244 = vmatpush1.msra.mxu0 0.0
    %245 = vmatprep.subr.mxu0 0.0
    %246 = vmatpush1.msra.mxu0 0.0
    %247 = vmatprep.subr.mxu0 0.0
    %248 = vmatpush1.msra.mxu0 0.0
    %249 = vmatprep.subr.mxu0 0.0
    %250 = vmatpush1.msra.mxu0 0.0
    %251 = vmatprep.subr.mxu0 0.0
    %252 = vmatpush1.msra.mxu0 0.0
    %253 = vmatprep.subr.mxu0 0.0
    %254 = vmatpush1.msra.mxu0 0.0
    %255 = vmatprep.subr.mxu0 0.0
    %256 = vmatpush1.msra.mxu0 0.0
    %257 = vmatprep.mubr.f32.mxu0 0.0
    %258 = vmatmul.mubr.f32.gmra.mrb[0].mxu0 %v168
    %v259 = vpop.f32.mrb[0].mxu0
    %v260 = vadd.f32 %v191, %v259
    %v261 = vpop.f32.mrb[0].mxu0
    %262 = vmatprep.mubr.f32.mxu0 0.0
    %263 = vmatmul.mubr.f32.gmra.mrb[0].mxu0 %v169
    %v264 = vpop.f32.mrb[0].mxu0
    %v265 = vadd.f32 %v191, %v264
    %v266 = vpop.f32.mrb[0].mxu0
    %267 = vdwg.mxu0
    %v268 = vmax.f32 %v260, 0.0
    %v269 = vmax.f32 %v265, 0.0
    %v270 = vld [vmem:[#allocation6] sm:$0xff]
    %v271 = vld [vmem:[#allocation6 + $0x8] sm:$0xff]
    %v272 = vld [vmem:[#allocation6 + $0x10] sm:$0xff]
    %v273 = vld [vmem:[#allocation6 + $0x18] sm:$0xff]
    %v274 = vld [vmem:[#allocation6 + $0x20] sm:$0xff]
    %v275 = vld [vmem:[#allocation6 + $0x28] sm:$0xff]
    %v276 = vld [vmem:[#allocation6 + $0x30] sm:$0xff]
    %v277 = vld [vmem:[#allocation6 + $0x38] sm:$0xff]
    %v278 = vld [vmem:[#allocation6 + $0x40] sm:$0xff]
    %v279 = vld [vmem:[#allocation6 + $0x48] sm:$0xff]
    %v280 = vld [vmem:[#allocation6 + $0x50] sm:$0xff]
    %v281 = vld [vmem:[#allocation6 + $0x58] sm:$0xff]
    %v282 = vld [vmem:[#allocation6 + $0x60] sm:$0xff]
    %v283 = vld [vmem:[#allocation6 + $0x68] sm:$0xff]
    %v284 = vld [vmem:[#allocation6 + $0x70] sm:$0xff]
    %v285 = vld [vmem:[#allocation6 + $0x78] sm:$0xff]
    %v286 = vld [vmem:[%s6] sm:$0x1]
    %v288 = vlaneseq
    %v289 = vshrl.u32 %v288, 7
    %v290 = vsub.s32 0, %v289
    %v291 = vrot.slane %v286, %v290
    %293 = vmatprep.subr.mxu0 0.0
    %294 = vmatpush1.msra.mxu0 %v270
    %295 = vmatprep.subr.mxu0 0.0
    %296 = vmatpush1.msra.mxu0 %v271
    %297 = vmatprep.subr.mxu0 0.0
    %298 = vmatpush1.msra.mxu0 %v272
    %299 = vmatprep.subr.mxu0 0.0
    %300 = vmatpush1.msra.mxu0 %v273
    %301 = vmatprep.subr.mxu0 0.0
    %302 = vmatpush1.msra.mxu0 %v274
    %303 = vmatprep.subr.mxu0 0.0
    %304 = vmatpush1.msra.mxu0 %v275
    %305 = vmatprep.subr.mxu0 0.0
    %306 = vmatpush1.msra.mxu0 %v276
    %307 = vmatprep.subr.mxu0 0.0
    %308 = vmatpush1.msra.mxu0 %v277
    %309 = vmatprep.subr.mxu0 0.0
    %310 = vmatpush1.msra.mxu0 %v278
    %311 = vmatprep.subr.mxu0 0.0
    %312 = vmatpush1.msra.mxu0 %v279
    %313 = vmatprep.subr.mxu0 0.0
    %314 = vmatpush1.msra.mxu0 %v280
    %315 = vmatprep.subr.mxu0 0.0
    %316 = vmatpush1.msra.mxu0 %v281
    %317 = vmatprep.subr.mxu0 0.0
    %318 = vmatpush1.msra.mxu0 %v282
    %319 = vmatprep.subr.mxu0 0.0
    %320 = vmatpush1.msra.mxu0 %v283
    %321 = vmatprep.subr.mxu0 0.0
    %322 = vmatpush1.msra.mxu0 %v284
    %323 = vmatprep.subr.mxu0 0.0
    %324 = vmatpush1.msra.mxu0 %v285
    %325 = vmatprep.subr.mxu0 0.0
    %326 = vmatpush1.msra.mxu0 0.0
    %327 = vmatprep.subr.mxu0 0.0
    %328 = vmatpush1.msra.mxu0 0.0
    %329 = vmatprep.subr.mxu0 0.0
    %330 = vmatpush1.msra.mxu0 0.0
    %331 = vmatprep.subr.mxu0 0.0
    %332 = vmatpush1.msra.mxu0 0.0
    %333 = vmatprep.subr.mxu0 0.0
    %334 = vmatpush1.msra.mxu0 0.0
    %335 = vmatprep.subr.mxu0 0.0
    %336 = vmatpush1.msra.mxu0 0.0
    %337 = vmatprep.subr.mxu0 0.0
    %338 = vmatpush1.msra.mxu0 0.0
    %339 = vmatprep.subr.mxu0 0.0
    %340 = vmatpush1.msra.mxu0 0.0
    %341 = vmatprep.subr.mxu0 0.0
    %342 = vmatpush1.msra.mxu0 0.0
    %343 = vmatprep.subr.mxu0 0.0
    %344 = vmatpush1.msra.mxu0 0.0
    %345 = vmatprep.subr.mxu0 0.0
    %346 = vmatpush1.msra.mxu0 0.0
    %347 = vmatprep.subr.mxu0 0.0
    %348 = vmatpush1.msra.mxu0 0.0
    %349 = vmatprep.subr.mxu0 0.0
    %350 = vmatpush1.msra.mxu0 0.0
    %351 = vmatprep.subr.mxu0 0.0
    %352 = vmatpush1.msra.mxu0 0.0
    %353 = vmatprep.subr.mxu0 0.0
    %354 = vmatpush1.msra.mxu0 0.0
    %355 = vmatprep.subr.mxu0 0.0
    %356 = vmatpush1.msra.mxu0 0.0
    %357 = vmatprep.mubr.f32.mxu0 0.0
    %358 = vmatmul.mubr.f32.gmra.mrb[0].mxu0 %v268
    %v359 = vpop.f32.mrb[0].mxu0
    %v360 = vadd.f32 %v291, %v359
    %v361 = vpop.f32.mrb[0].mxu0
    %362 = vmatprep.mubr.f32.mxu0 0.0
    %363 = vmatmul.mubr.f32.gmra.mrb[0].mxu0 %v269
    %v364 = vpop.f32.mrb[0].mxu0
    %v365 = vadd.f32 %v291, %v364
    %v366 = vpop.f32.mrb[0].mxu0
    %367 = vdwg.mxu0
    %v368 = vmax.f32 %v360, 0.0
    %v369 = vmax.f32 %v365, 0.0
    %v370 = vld [vmem:[%s7] sm:$0xff]
    %v371 = vld [vmem:[%s7 + $0x8] sm:$0xff]
    %v372 = vld [vmem:[%s7 + $0x10] sm:$0xff]
    %v373 = vld [vmem:[%s7 + $0x18] sm:$0xff]
    %v374 = vld [vmem:[%s7 + $0x20] sm:$0xff]
    %v375 = vld [vmem:[%s7 + $0x28] sm:$0xff]
    %v376 = vld [vmem:[%s7 + $0x30] sm:$0xff]
    %v377 = vld [vmem:[%s7 + $0x38] sm:$0xff]
    %v378 = vld [vmem:[%s7 + $0x40] sm:$0xff]
    %v379 = vld [vmem:[%s7 + $0x48] sm:$0xff]
    %v380 = vld [vmem:[%s7 + $0x50] sm:$0xff]
    %v381 = vld [vmem:[%s7 + $0x58] sm:$0xff]
    %v382 = vld [vmem:[%s7 + $0x60] sm:$0xff]
    %v383 = vld [vmem:[%s7 + $0x68] sm:$0xff]
    %v384 = vld [vmem:[%s7 + $0x70] sm:$0xff]
    %v385 = vld [vmem:[%s7 + $0x78] sm:$0xff]
    %v386 = vld [vmem:[%s8] sm:$0x1]
    %v388 = vlaneseq
    %v389 = vshrl.u32 %v388, 7
    %v390 = vsub.s32 0, %v389
    %v391 = vrot.slane %v386, %v390
    %393 = vmatprep.subr.mxu0 0.0
    %394 = vmatpush1.msra.mxu0 %v370
    %395 = vmatprep.subr.mxu0 0.0
    %396 = vmatpush1.msra.mxu0 %v371
    %397 = vmatprep.subr.mxu0 0.0
    %398 = vmatpush1.msra.mxu0 %v372
    %399 = vmatprep.subr.mxu0 0.0
    %400 = vmatpush1.msra.mxu0 %v373
    %401 = vmatprep.subr.mxu0 0.0
    %402 = vmatpush1.msra.mxu0 %v374
    %403 = vmatprep.subr.mxu0 0.0
    %404 = vmatpush1.msra.mxu0 %v375
    %405 = vmatprep.subr.mxu0 0.0
    %406 = vmatpush1.msra.mxu0 %v376
    %407 = vmatprep.subr.mxu0 0.0
    %408 = vmatpush1.msra.mxu0 %v377
    %409 = vmatprep.subr.mxu0 0.0
    %410 = vmatpush1.msra.mxu0 %v378
    %411 = vmatprep.subr.mxu0 0.0
    %412 = vmatpush1.msra.mxu0 %v379
    %413 = vmatprep.subr.mxu0 0.0
    %414 = vmatpush1.msra.mxu0 %v380
    %415 = vmatprep.subr.mxu0 0.0
    %416 = vmatpush1.msra.mxu0 %v381
    %417 = vmatprep.subr.mxu0 0.0
    %418 = vmatpush1.msra.mxu0 %v382
    %419 = vmatprep.subr.mxu0 0.0
    %420 = vmatpush1.msra.mxu0 %v383
    %421 = vmatprep.subr.mxu0 0.0
    %422 = vmatpush1.msra.mxu0 %v384
    %423 = vmatprep.subr.mxu0 0.0
    %424 = vmatpush1.msra.mxu0 %v385
    %425 = vmatprep.subr.mxu0 0.0
    %426 = vmatpush1.msra.mxu0 0.0
    %427 = vmatprep.subr.mxu0 0.0
    %428 = vmatpush1.msra.mxu0 0.0
    %429 = vmatprep.subr.mxu0 0.0
    %430 = vmatpush1.msra.mxu0 0.0
    %431 = vmatprep.subr.mxu0 0.0
    %432 = vmatpush1.msra.mxu0 0.0
    %433 = vmatprep.subr.mxu0 0.0
    %434 = vmatpush1.msra.mxu0 0.0
    %435 = vmatprep.subr.mxu0 0.0
    %436 = vmatpush1.msra.mxu0 0.0
    %437 = vmatprep.subr.mxu0 0.0
    %438 = vmatpush1.msra.mxu0 0.0
    %439 = vmatprep.subr.mxu0 0.0
    %440 = vmatpush1.msra.mxu0 0.0
    %441 = vmatprep.subr.mxu0 0.0
    %442 = vmatpush1.msra.mxu0 0.0
    %443 = vmatprep.subr.mxu0 0.0
    %444 = vmatpush1.msra.mxu0 0.0
    %445 = vmatprep.subr.mxu0 0.0
    %446 = vmatpush1.msra.mxu0 0.0
    %447 = vmatprep.subr.mxu0 0.0
    %448 = vmatpush1.msra.mxu0 0.0
    %449 = vmatprep.subr.mxu0 0.0
    %450 = vmatpush1.msra.mxu0 0.0
    %451 = vmatprep.subr.mxu0 0.0
    %452 = vmatpush1.msra.mxu0 0.0
    %453 = vmatprep.subr.mxu0 0.0
    %454 = vmatpush1.msra.mxu0 0.0
    %455 = vmatprep.subr.mxu0 0.0
    %456 = vmatpush1.msra.mxu0 0.0
    %457 = vmatprep.mubr.f32.mxu0 0.0
    %458 = vmatmul.mubr.f32.gmra.mrb[0].mxu0 %v368
    %v459 = vpop.f32.mrb[0].mxu0
    %v460 = vadd.f32 %v391, %v459
    %v461 = vpop.f32.mrb[0].mxu0
    %462 = vmatprep.mubr.f32.mxu0 0.0
    %463 = vmatmul.mubr.f32.gmra.mrb[0].mxu0 %v369
    %v464 = vpop.f32.mrb[0].mxu0
    %v465 = vadd.f32 %v391, %v464
    %v466 = vpop.f32.mrb[0].mxu0
    %467 = vdwg.mxu0
    %vm468 = vcmask 15360
    %469 = vst.msk [vmem:[%s9] sm:$0xff] %vm468, %v460
    %470 = vst.msk [vmem:[%s9 + $0x8] sm:$0xff] %vm468, %v465
    // Predicated region
    $region50: #{tpu_custom_call.1} parent=1 // pred_check
      _
    $region51: #{tpu_custom_call.1} parent=1 // pred_check_branch
      %472 = sbr.rel (0) target = $region53
    $region52: #{tpu_custom_call.1} parent=1 // pred_region
      _
    $region53: #{tpu_custom_call.1} parent=1 // pred_fallthru
      _
    // Predicated region
    $region54: #{tpu_custom_call.1} parent=1 // pred_check
      _
    $region55: #{tpu_custom_call.1} parent=1 // pred_check_branch
      %474 = sbr.rel (0) target = $region57
    $region56: #{tpu_custom_call.1} parent=1 // pred_region
      _
    $region57: #{tpu_custom_call.1} parent=1 // pred_fallthru
      _
    %475 = vsyncpa [#allocation3], 1
    %476 = vsyncpa [#allocation5], 1

</llo_original>
